<compile_context>
chip_gen: v6e
topology: v6e:2x2x1
jax: 0.10.0
libtpu: 0.0.40
codegen_flags: <defaults>
</compile_context>

<pallas_src>
import functools

import jax
import jax.numpy as jnp
from jax import lax
from jax.experimental import pallas as pl
from jax.experimental.pallas import tpu as pltpu

LANE = 128
CHUNK_ROWS = 512                      # sub-chunk rows for the in-tile reduction
TARGET_BLOCK_BYTES = 4 * 1024 * 1024  # per-input block (x2 inputs x2 buffers = 16 MiB)
MIN_TILE_ROWS = 512                   # never split below ~256 KiB f32 blocks
VMEM_LIMIT = 32 * 1024 * 1024         # <= physical VMEM on v5e/v6e/v7x


def _round_up(a, b):
    return ((a + b - 1) // b) * b


def _focal_loss_kernel(x_ref, t_ref, out_ref, *, gamma, gamma_int, tile_rows,
                       chunk_rows, n_valid_last, num_tiles):
    """One grid step: focal-loss partial sum over a (tile_rows, 128) slab -> (8, 128)."""

    def chunk_partial(r0, nrows, valid):
        # Rows [r0, r0 + nrows) of this tile; `valid` is None (all valid) or the
        # static number of valid elements within this chunk.
        x = x_ref[r0:r0 + nrows, :]
        t = t_ref[r0:r0 + nrows, :]
        # Native-dtype multiply (exact for 0/1 targets), single upcast of yx.
        yx = ((t * 2.0 - 1.0) * x).astype(jnp.float32)

        e = jnp.exp(-jnp.abs(yx))                        # EUP
        loss = jnp.log1p(e) + jnp.maximum(-yx, 0.0)      # = -logsigmoid(yx)

        if gamma_int is not None:
            if gamma_int == 0:
                focal = loss
            else:
                # sigmoid(-yx) = where(yx>=0, e, 1) / (1 + e); reuse e, approx vrcp.
                sig = jnp.where(yx >= 0.0, e, 1.0) * pl.reciprocal(1.0 + e, approx=True)
                w = sig
                for _ in range(gamma_int - 1):
                    w = w * sig
                focal = w * loss
        else:
            # logsigmoid(-yx) = logsigmoid(yx) - yx = -loss - yx   (always <= 0)
            focal = jnp.exp(gamma * (-loss - yx)) * loss

        if valid is not None and valid < nrows * LANE:
            # Tile/chunk-relative index -> no int32 overflow for huge inputs.
            idx = (lax.broadcasted_iota(jnp.int32, (nrows, LANE), 0) * LANE
                   + lax.broadcasted_iota(jnp.int32, (nrows, LANE), 1))
            focal = jnp.where(idx < valid, focal, 0.0)

        # nrows -> 8 sublanes via elementwise adds across vreg groups.
        return focal.reshape(nrows // 8, 8, LANE).sum(axis=0)

    def tile_sum(valid_elems):
        acc = jnp.zeros((8, LANE), jnp.float32)
        r0 = 0
        while r0 < tile_rows:
            nrows = min(chunk_rows, tile_rows - r0)
            start = r0 * LANE
            if valid_elems is not None and start >= valid_elems:
                break                                    # rest of tile is padding
            v = None
            if valid_elems is not None and valid_elems < start + nrows * LANE:
                v = valid_elems - start
            acc = acc + chunk_partial(r0, nrows, v)
            r0 += nrows
        return acc

    if n_valid_last >= tile_rows * LANE:                 # no ragged tail anywhere
        out_ref[...] = tile_sum(None)
    elif num_tiles == 1:                                 # single (ragged) tile
        out_ref[...] = tile_sum(n_valid_last)
    else:
        is_last = pl.program_id(0) == num_tiles - 1

        @pl.when(jnp.logical_not(is_last))
        def _():
            out_ref[...] = tile_sum(None)

        @pl.when(is_last)
        def _():
            out_ref[...] = tile_sum(n_valid_last)


def focal_loss(input_, target, gamma):
    """Pallas implementation of FocalLoss(gamma)(input_, target)."""
    if input_.shape != target.shape:
        raise ValueError(
            "Target size ({}) and input size ({}) must be the same".format(
                target.shape, input_.shape))

    n = input_.size
    itemsize = input_.dtype.itemsize
    row_align = max(8, 32 // max(itemsize, 1))           # 8 f32 / 16 bf16 / 32 int8
    max_tile_rows = max(row_align, TARGET_BLOCK_BYTES // (LANE * itemsize))

    rows_needed = pl.cdiv(n, LANE)
    rows = _round_up(rows_needed, row_align)

    x = input_.reshape(-1)
    t = target.reshape(-1)
    pad = rows * LANE - n
    if pad:
        # Only lane/sublane alignment padding; already-aligned sizes (the common
        # case) take the free-reshape path with no HBM copy at all.
        x = jnp.pad(x, (0, pad))
        t = jnp.pad(t, (0, pad))
    x2 = x.reshape(rows, LANE)
    t2 = t.reshape(rows, LANE)

    # Large blocks (HBM-bound), but keep >= ~4 grid steps for bigger inputs so
    # both v7x TensorCores get work; never split below MIN_TILE_ROWS rows.
    split = _round_up(pl.cdiv(rows, 4), row_align)
    tile_rows = min(max_tile_rows, rows, max(split, min(MIN_TILE_ROWS, rows)))
    num_tiles = pl.cdiv(rows, tile_rows)
    n_valid_last = n - (num_tiles - 1) * tile_rows * LANE

    g = float(gamma)
    gamma_int = int(g) if (g.is_integer() and 0.0 <= g <= 8.0) else None

    kernel = functools.partial(
        _focal_loss_kernel,
        gamma=g,
        gamma_int=gamma_int,
        tile_rows=tile_rows,
        chunk_rows=min(CHUNK_ROWS, tile_rows),
        n_valid_last=n_valid_last,
        num_tiles=num_tiles,
    )

    in_spec = pl.BlockSpec((tile_rows, LANE), lambda i: (i, 0))
    partials = pl.pallas_call(
        kernel,
        out_shape=jax.ShapeDtypeStruct((num_tiles, 8, LANE), jnp.float32),
        grid=(num_tiles,),
        in_specs=[in_spec, in_spec],
        out_specs=pl.BlockSpec((None, 8, LANE), lambda i: (i, 0, 0)),
        compiler_params=pltpu.CompilerParams(
            dimension_semantics=("parallel",),
            vmem_limit_bytes=VMEM_LIMIT,
        ),
    )(x2, t2)

    return jnp.sum(partials) / jnp.float32(n)


def _focal_loss_ref(input_, target, gamma):
    x = input_.astype(jnp.float32)
    t = target.astype(jnp.float32)
    yx = (t * 2.0 - 1.0) * x
    loss = -jax.nn.log_sigmoid(yx)
    focal = jnp.exp(gamma * jax.nn.log_sigmoid(-yx)) * loss
    return jnp.mean(focal)


if __name__ == "__main__":
    key = jax.random.PRNGKey(0)
    k_x, k_t = jax.random.split(key)

    # 1) f32, lane/sublane aligned (no pad, no mask), gamma=2 integer fast path.
    x = jax.random.normal(k_x, (2, 4, 16, 16), dtype=jnp.float32)
    t = jax.random.bernoulli(k_t, 0.5, (2, 4, 16, 16)).astype(jnp.float32)
    out = jax.block_until_ready(focal_loss(x, t, 2.0))
    ref = jax.block_until_ready(_focal_loss_ref(x, t, 2.0))
    assert jnp.allclose(out, ref, atol=1e-5, rtol=2e-3), (out, ref)

    # 2) bf16, ragged size (in-kernel tail mask), non-integer gamma (general path).
    k_x2, k_t2 = jax.random.split(k_x)
    x_odd = jax.random.normal(k_x2, (3, 5, 17, 13), dtype=jnp.bfloat16)
    t_odd = jax.random.bernoulli(k_t2, 0.3, (3, 5, 17, 13)).astype(jnp.bfloat16)
    out2 = jax.block_until_ready(focal_loss(x_odd, t_odd, 1.5))
    ref2 = jax.block_until_ready(_focal_loss_ref(x_odd, t_odd, 1.5))
    assert jnp.allclose(out2, ref2, atol=1e-5, rtol=2e-3), (out2, ref2)

    # 3) multi-tile grid: exercises the pl.when last-tile gating + integer gamma.
    k_x3, k_t3 = jax.random.split(k_t)
    x_big = jax.random.normal(k_x3, (2, 4, 96, 96), dtype=jnp.float32)
    t_big = jax.random.bernoulli(k_t3, 0.5, (2, 4, 96, 96)).astype(jnp.float32)
    out3 = jax.block_until_ready(focal_loss(x_big, t_big, 2.0))
    ref3 = jax.block_until_ready(_focal_loss_ref(x_big, t_big, 2.0))
    assert jnp.allclose(out3, ref3, atol=1e-5, rtol=2e-3), (out3, ref3)

    print("KERNEL_OK")
</pallas_src>

<mosaic_0001>
module attributes {stable_mosaic.version = 11 : i64} {
  func.func @_focal_loss_kernel(%arg0: i32, %arg1: memref<16x128xf32, #tpu.memory_space<vmem>>, %arg2: memref<16x128xf32, #tpu.memory_space<vmem>>, %arg3: memref<1x8x128xf32, #tpu.memory_space<vmem>>) attributes {dimension_semantics = [#tpu.dimension_semantics<parallel>], iteration_bounds = array<i64: 1>, scalar_prefetch = 0 : i64, scratch_operands = 0 : i64, tpu.core_type = #tpu.core_type<tc>, window_params = [{transform_indices = @transform_0, window_bounds = array<i64: 16, 128>}, {transform_indices = @transform_1, window_bounds = array<i64: 16, 128>}, {transform_indices = @transform_2, window_bounds = array<i64: 1, 8, 128>}]} {
    %cst = arith.constant 0.000000e+00 : f32
    %0 = vector.broadcast %cst : f32 to vector<8x128xf32>
    %c0 = arith.constant 0 : index
    %c0_0 = arith.constant 0 : index
    %1 = vector.load %arg1[%c0, %c0_0] : memref<16x128xf32, #tpu.memory_space<vmem>>, vector<16x128xf32>
    %c0_1 = arith.constant 0 : index
    %c0_2 = arith.constant 0 : index
    %2 = vector.load %arg2[%c0_1, %c0_2] : memref<16x128xf32, #tpu.memory_space<vmem>>, vector<16x128xf32>
    %cst_3 = arith.constant 2.000000e+00 : f32
    %3 = vector.broadcast %cst_3 : f32 to vector<16x128xf32>
    %4 = arith.mulf %2, %3 : vector<16x128xf32>
    %cst_4 = arith.constant 1.000000e+00 : f32
    %5 = vector.broadcast %cst_4 : f32 to vector<16x128xf32>
    %6 = arith.subf %4, %5 : vector<16x128xf32>
    %7 = arith.mulf %6, %1 : vector<16x128xf32>
    %8 = math.absf %7 : vector<16x128xf32>
    %cst_5 = arith.constant 0.000000e+00 : f32
    %9 = vector.broadcast %cst_5 : f32 to vector<16x128xf32>
    %10 = arith.subf %9, %8 : vector<16x128xf32>
    %11 = math.exp %10 : vector<16x128xf32>
    %12 = math.log1p %11 : vector<16x128xf32>
    %cst_6 = arith.constant 0.000000e+00 : f32
    %13 = vector.broadcast %cst_6 : f32 to vector<16x128xf32>
    %14 = arith.subf %13, %7 : vector<16x128xf32>
    %cst_7 = arith.constant 0.000000e+00 : f32
    %15 = vector.broadcast %cst_7 : f32 to vector<16x128xf32>
    %16 = arith.maximumf %14, %15 : vector<16x128xf32>
    %17 = arith.addf %12, %16 : vector<16x128xf32>
    %cst_8 = arith.constant 0.000000e+00 : f32
    %18 = vector.broadcast %cst_8 : f32 to vector<16x128xf32>
    %19 = arith.cmpf oge, %7, %18 : vector<16x128xf32>
    %cst_9 = arith.constant 1.000000e+00 : f32
    %20 = vector.broadcast %cst_9 : f32 to vector<16x128xf32>
    %21 = arith.select %19, %11, %20 : vector<16x128xi1>, vector<16x128xf32>
    %cst_10 = arith.constant 1.000000e+00 : f32
    %22 = vector.broadcast %cst_10 : f32 to vector<16x128xf32>
    %23 = arith.addf %22, %11 : vector<16x128xf32>
    %24 = tpu.reciprocal %23 {approx = true} : vector<16x128xf32> -> vector<16x128xf32>
    %25 = arith.mulf %21, %24 : vector<16x128xf32>
    %26 = arith.mulf %25, %25 : vector<16x128xf32>
    %27 = arith.mulf %26, %17 : vector<16x128xf32>
    %28 = vector.shape_cast %27 : vector<16x128xf32> to vector<2x8x128xf32>
    %cst_11 = arith.constant dense<0.000000e+00> : vector<8x128xf32>
    %29 = vector.multi_reduction <add>, %28, %cst_11 [0] : vector<2x8x128xf32> to vector<8x128xf32>
    %30 = arith.addf %0, %29 : vector<8x128xf32>
    %c0_12 = arith.constant 0 : index
    %c0_13 = arith.constant 0 : index
    %c0_14 = arith.constant 0 : index
    %31 = vector.load %arg3[%c0_12, %c0_13, %c0_14] : memref<1x8x128xf32, #tpu.memory_space<vmem>>, vector<1x8x128xf32>
    %32 = vector.shape_cast %31 : vector<1x8x128xf32> to vector<8x128xf32>
    %33 = vector.shape_cast %30 : vector<8x128xf32> to vector<1x8x128xf32>
    tpu.vector_store %arg3[%c0_12, %c0_13, %c0_14], %33 {strides = array<i32>} : memref<1x8x128xf32, #tpu.memory_space<vmem>>, vector<1x8x128xf32>,
    return
  }
  func.func @transform_0(%arg0: i32) -> (i32, i32) {
    %c0_i32 = arith.constant 0 : i32
    %c0_i32_0 = arith.constant 0 : i32
    return %arg0, %c0_i32 : i32, i32
  }
  func.func @transform_1(%arg0: i32) -> (i32, i32) {
    %c0_i32 = arith.constant 0 : i32
    %c0_i32_0 = arith.constant 0 : i32
    return %arg0, %c0_i32 : i32, i32
  }
  func.func @transform_2(%arg0: i32) -> (i32, i32, i32) {
    %c0_i32 = arith.constant 0 : i32
    %c0_i32_0 = arith.constant 0 : i32
    %c0_i32_1 = arith.constant 0 : i32
    return %arg0, %c0_i32, %c0_i32_0 : i32, i32, i32
  }
}

</mosaic_0001>

<llo_original>
// kernel: tpu_custom_call.1
$region0: #{tpu_custom_call.1}
  #allocation0 [shape = 'u32[]', space=smem, size = 0x4, offset = 0x4, fixed_abs, tag = 'smem constant byte address 0x4 - core index']
  #allocation1 [shape = 'u32[144,128]{1,0:T(1,128)}', space=vmem, size = 0x12000, scoped, tag = 'internal scratch']
  %s0 = inlined_call_operand.hbm [shape: f32[16,128], index: 0, kind: input, shape index: {}]
  %s1 = inlined_call_operand.hbm [shape: f32[16,128], index: 1, kind: input, shape index: {}]
  %s2 = inlined_call_operand.hbm [shape: f32[1,8,128], index: 2, kind: output, shape index: {}]
  %s3 = sld [smem:[#allocation0]]
  $region26: #{tpu_custom_call.1} parent=0
    _
  %s5 = ssub.s32 1, %s3
  %s6 = scalar_select 0, %s5, %s3
  $region1: #{tpu_custom_call.1} parent=0
    #allocation2 [shape = 'u8[8192]{0}', space=vmem, size = 0x2000, scoped, tag = 'input window, operand 0, single buffered']
    #allocation3 [shape = 's32[1]{0}', space=sflag, size = 0x4, scoped, tag = 'scoped memory for tpu_custom_call.1']
    #allocation4 [shape = 's32[1]{0}', space=sflag, size = 0x4, scoped, tag = 'scoped memory for tpu_custom_call.1']
    #allocation5 [shape = 'u8[8192]{0}', space=vmem, size = 0x2000, scoped, tag = 'input window, operand 1, single buffered']
    #allocation6 [shape = 's32[1]{0}', space=sflag, size = 0x4, scoped, tag = 'scoped memory for tpu_custom_call.1']
    #allocation7 [shape = 'u8[4096]{0}', space=vmem, size = 0x1000, scoped, tag = 'output window, operand 0, single buffered']
    %7 = vsyncpa [#allocation3], 0
    %8 = vsyncpa [#allocation6], 0
    %9 = vsyncpa [#allocation4], 0
    // Predicated region
    $region2: #{tpu_custom_call.1} parent=1 // pred_check
      _
    $region3: #{tpu_custom_call.1} parent=1 // pred_check_branch
      %11 = sbr.rel (0) target = $region5
    $region4: #{tpu_custom_call.1} parent=1 // pred_region
      %s13 = ssub.s32 256, 256
      %14 = vsyncadd [#allocation3], %s13
      %s15 = sshll.u32 [#allocation2], 4
      %s16 = int_to_ptr.vmem [resolvable:$true] %s15
      %21 = dma.hbm_to_vmem [thread:$0]  %s0, 256, %s16, [#allocation3], 128, 128, 8
    $region5: #{tpu_custom_call.1} parent=1 // pred_fallthru
      _
    // Predicated region
    $region6: #{tpu_custom_call.1} parent=1 // pred_check
      _
    $region7: #{tpu_custom_call.1} parent=1 // pred_check_branch
      %23 = sbr.rel (0) target = $region9
    $region8: #{tpu_custom_call.1} parent=1 // pred_region
      %s25 = ssub.s32 256, 256
      %26 = vsyncadd [#allocation6], %s25
      %s27 = sshll.u32 [#allocation5], 4
      %s28 = int_to_ptr.vmem [resolvable:$true] %s27
      %33 = dma.hbm_to_vmem [thread:$0]  %s1, 256, %s28, [#allocation6], 128, 128, 8
    $region9: #{tpu_custom_call.1} parent=1 // pred_fallthru
      _
    // Predicated region
    $region10: #{tpu_custom_call.1} parent=1 // pred_check
      _
    $region11: #{tpu_custom_call.1} parent=1 // pred_check_branch
      %35 = sbr.rel (0) target = $region13
    $region12: #{tpu_custom_call.1} parent=1 // pred_region
      %36 = dma.done [#allocation3], 256
    $region13: #{tpu_custom_call.1} parent=1 // pred_fallthru
      _
    // Predicated region
    $region14: #{tpu_custom_call.1} parent=1 // pred_check
      _
    $region15: #{tpu_custom_call.1} parent=1 // pred_check_branch
      %38 = sbr.rel (0) target = $region17
    $region16: #{tpu_custom_call.1} parent=1 // pred_region
      %39 = dma.done [#allocation6], 256
    $region17: #{tpu_custom_call.1} parent=1 // pred_fallthru
      _
    %v40 = vld [vmem:[#allocation2] sm:$0xff]
    %v41 = vld [vmem:[#allocation2 + $0x8] sm:$0xff]
    %v42 = vld [vmem:[#allocation5] sm:$0xff]
    %v43 = vld [vmem:[#allocation5 + $0x8] sm:$0xff]
    %v44 = vmul.f32 %v42, 2.0
    %v45 = vmul.f32 %v43, 2.0
    %v46 = vsub.f32 %v44, 1.0
    %v47 = vsub.f32 %v45, 1.0
    %v48 = vmul.f32 %v46, %v40
    %v49 = vmul.f32 %v47, %v41
    %v50 = vand.u32 2147483647, %v48
    %v51 = vand.u32 2147483647, %v49
    %v52 = vsub.f32 0.0, %v50
    %v53 = vsub.f32 0.0, %v51
    %v54 = vmul.f32 %v52, 1.442695
    %v55 = vpow.pop %v54
    %v56 = vmul.f32 %v53, 1.442695
    %v57 = vpow.pop %v56
    %v58 = vadd.f32 %v55, 1.0
    %v59 = vlog2.pop %v58
    %v60 = vmul.f32 %v59, 0.6931472
    %v61 = vmul.f32 -0.5, %v55
    %v62 = vadd.f32 %v61, 1.0
    %v63 = vmul.f32 %v62, %v55
    %v64 = vand.u32 2147483647, %v55
    %vm65 = vcmp.lt.f32.partialorder %v64, 0.0004427343
    %v66 = vsel %vm65, %v63, %v60
    %v67 = vadd.f32 %v57, 1.0
    %v68 = vlog2.pop %v67
    %v69 = vmul.f32 %v68, 0.6931472
    %v70 = vmul.f32 -0.5, %v57
    %v71 = vadd.f32 %v70, 1.0
    %v72 = vmul.f32 %v71, %v57
    %v73 = vand.u32 2147483647, %v57
    %vm74 = vcmp.lt.f32.partialorder %v73, 0.0004427343
    %v75 = vsel %vm74, %v72, %v69
    %v76 = vsub.f32 0.0, %v48
    %v77 = vsub.f32 0.0, %v49
    %v78 = vmax.f32 %v76, 0.0
    %v79 = vmax.f32 %v77, 0.0
    %v80 = vadd.f32 %v66, %v78
    %v81 = vadd.f32 %v75, %v79
    %vm82 = vcmp.ge.f32.partialorder %v48, 0.0
    %vm83 = vcmp.ge.f32.partialorder %v49, 0.0
    %v84 = vsel %vm82, %v55, 1.0
    %v85 = vsel %vm83, %v57, 1.0
    %v86 = vadd.f32 %v55, 1.0
    %v87 = vadd.f32 %v57, 1.0
    %v88 = vrcp.pop %v86
    %v89 = vrcp.pop %v87
    %v90 = vmul.f32 %v84, %v88
    %v91 = vmul.f32 %v85, %v89
    %v92 = vmul.f32 %v90, %v90
    %v93 = vmul.f32 %v91, %v91
    %v94 = vmul.f32 %v92, %v80
    %v95 = vmul.f32 %v93, %v81
    %v96 = vadd.f32 %v94, %v95
    %v97 = vadd.f32 %v96, 0.0
    %98 = vst [vmem:[#allocation7] sm:$0xff] %v97
    // Predicated region
    $region18: #{tpu_custom_call.1} parent=1 // pred_check
      _
    $region19: #{tpu_custom_call.1} parent=1 // pred_check_branch
      %100 = sbr.rel (0) target = $region21
    $region20: #{tpu_custom_call.1} parent=1 // pred_region
      %s102 = ssub.s32 128, 128
      %103 = vsyncadd [#allocation4], %s102
      %s105 = sshll.u32 [#allocation7], 4
      %s106 = int_to_ptr.vmem [resolvable:$true] %s105
      %108 = dma.vmem_to_hbm [thread:$0]  %s106, 128, %s2, [#allocation4]
    $region21: #{tpu_custom_call.1} parent=1 // pred_fallthru
      _
    // Predicated region
    $region22: #{tpu_custom_call.1} parent=1 // pred_check
      _
    $region23: #{tpu_custom_call.1} parent=1 // pred_check_branch
      %110 = sbr.rel (0) target = $region25
    $region24: #{tpu_custom_call.1} parent=1 // pred_region
      %111 = dma.done [#allocation4], 128
    $region25: #{tpu_custom_call.1} parent=1 // pred_fallthru
      _
    %112 = vsyncpa [#allocation3], 1
    %113 = vsyncpa [#allocation6], 1
    %114 = vsyncpa [#allocation4], 1

</llo_original>
